<compile_context>
chip_gen: v7x
topology: tpu7x:2x2x1
jax: 0.10.0
libtpu: 0.0.40
codegen_flags: <defaults>
</compile_context>

<pallas_src>
import functools
import math

import jax
import jax.numpy as jnp
from jax.experimental import pallas as pl
from jax.experimental.pallas import tpu as pltpu


def _fused_attention_kernel(x_ref, w_ref, b_ref, o_ref, *, g, b_pad, b_actual, d_in, d_pad):
    """One grid step = G independent (b_pad, d_in) attention problems.

    x_ref: [g, b_pad, d_in] f32     w_ref: [d_in, 3*d_pad] bf16    b_ref: [1, 3*d_pad] f32
    o_ref: [g, b_pad, d_in] f32
    The 1/sqrt(D) scale is already folded into the Q slice of w_ref / b_ref.
    Q/K/V each occupy a 128-aligned column band of w_ref (padded cols are zero).
    """
    # Flatten all G*B rows into one MXU-filling fused QKV projection (bf16 x bf16 -> f32).
    x = x_ref[...].astype(jnp.bfloat16).reshape(g * b_pad, d_in)
    qkv = jnp.dot(x, w_ref[...], preferred_element_type=jnp.float32) + b_ref[...]
    qkv = qkv.reshape(g, b_pad, 3 * d_pad)

    # Vreg-aligned (128-lane) slices -> free.
    q = qkv[:, :, 0 * d_pad:1 * d_pad]          # already pre-scaled by 1/sqrt(D)
    k = qkv[:, :, 1 * d_pad:2 * d_pad]
    v = qkv[:, :, 2 * d_pad:3 * d_pad]

    # Per-problem scores = (Q/sqrt(D)) @ K^T.  Padded feature lanes are zero -> no effect.
    scores = jnp.einsum('gqd,gkd->gqk',
                        q.astype(jnp.bfloat16), k.astype(jnp.bfloat16),
                        preferred_element_type=jnp.float32)          # [g, Bp, Bp]

    # If the batch axis was padded, padded KEY rows must not receive softmax mass.
    if b_pad != b_actual:
        key_idx = jax.lax.broadcasted_iota(jnp.int32, scores.shape, 2)
        scores = jnp.where(key_idx < b_actual, scores, -jnp.inf)

    # Numerically-stable f32 softmax over the last axis; reciprocal on the EUP.
    m = jnp.max(scores, axis=-1, keepdims=True)
    e = jnp.exp(scores - m)
    attn = e * pl.reciprocal(jnp.sum(e, axis=-1, keepdims=True), approx=True)

    # values = attn @ V; emit only the real D feature columns (avoids a wrapper slice).
    values = jnp.einsum('gqk,gkd->gqd',
                        attn.astype(jnp.bfloat16), v.astype(jnp.bfloat16),
                        preferred_element_type=jnp.float32)          # [g, Bp, d_pad]
    o_ref[...] = values[:, :, :d_in].astype(o_ref.dtype)


def prepare_qkv_params(wq, bq, wk, bk, wv, bv):
    """One-time parameter prep (outside the hot path).

    Takes PyTorch-layout weights [out, in] and biases [out]; returns the fused
    W_qkv [D, 3*Dp] (bf16, Q slice pre-scaled by 1/sqrt(D), output cols zero-padded to
    128-lane bands), b_qkv [1, 3*Dp] (f32 - tiny, keeps the bias add exact), and Dp.
    """
    D = wq.shape[0]
    d_pad = max(128, ((D + 127) // 128) * 128)   # output-column band width (vreg aligned)
    scale = 1.0 / math.sqrt(float(D))

    def pad_cols(w):                 # [out, in] -> [in, out] -> [D, Dp]
        return jnp.pad(w.T, ((0, 0), (0, d_pad - D)))

    def pad_b(b):                    # [D] -> [Dp]
        return jnp.pad(b, (0, d_pad - D))

    w_qkv = jnp.concatenate(
        [pad_cols(wq * scale), pad_cols(wk), pad_cols(wv)], axis=1).astype(jnp.bfloat16)
    b_qkv = jnp.concatenate(
        [pad_b(bq * scale), pad_b(bk), pad_b(bv)]).reshape(1, 3 * d_pad).astype(jnp.float32)
    return w_qkv, b_qkv, d_pad


def _choose_group(p, target):
    """Largest divisor of p that is <= target (keeps the grid exact, no P padding)."""
    g = min(p, target)
    while p % g:
        g -= 1
    return g


def self_attention_pallas(x, w_qkv, b_qkv, d_pad, *, group_target=32):
    """x: [B, D] (single module forward) or [P, B, D] (P independent problems).

    group_target: problems per grid step (32 at B=8 -> 256 MXU rows, fills v6e/v7x;
    2 row passes on v5e which is also fine).
    """
    single = (x.ndim == 2)
    if single:
        x = x[None]
    P, B, D = x.shape
    assert w_qkv.shape == (D, 3 * d_pad)

    b_pad = ((B + 7) // 8) * 8
    if b_pad != B:
        # Only taken when B isn't a sublane multiple (not the case for the module's B=8);
        # padded key rows are masked to -inf in-kernel.
        x = jnp.pad(x, ((0, 0), (0, b_pad - B), (0, 0)))

    g = _choose_group(P, group_target)
    kernel = functools.partial(
        _fused_attention_kernel,
        g=g, b_pad=b_pad, b_actual=B, d_in=D, d_pad=d_pad)

    out = pl.pallas_call(
        kernel,
        out_shape=jax.ShapeDtypeStruct((P, b_pad, D), jnp.float32),
        grid=(P // g,),
        in_specs=[
            pl.BlockSpec((g, b_pad, D), lambda p: (p, 0, 0)),          # x: G problems/step
            pl.BlockSpec((D, 3 * d_pad), lambda p: (0, 0)),            # W_qkv: grid-invariant
            pl.BlockSpec((1, 3 * d_pad), lambda p: (0, 0)),            # b_qkv: grid-invariant
        ],
        out_specs=pl.BlockSpec((g, b_pad, D), lambda p: (p, 0, 0)),
        compiler_params=pltpu.CompilerParams(
            # TODO(synk): verify in a profile that this axis actually engages both v7x TCs;
            # switch to core-parallel semantics if not.
            dimension_semantics=("parallel",),
        ),
    )(x, w_qkv, b_qkv)

    if b_pad != B:
        out = out[:, :B, :]
    return out[0] if single else out


def self_attention_ref(x, wq, bq, wk, bk, wv, bv):
    D = x.shape[-1]
    q = x @ wq.T + bq
    k = x @ wk.T + bk
    v = x @ wv.T + bv
    scores = jnp.einsum('...qd,...kd->...qk', q, k) / jnp.sqrt(jnp.float32(D))
    attn = jax.nn.softmax(scores, axis=-1)
    return attn @ v


if __name__ == "__main__":
    B, D = 8, 32  # batch=8, input_dim=32 (as implied by the module forward)

    key = jax.random.PRNGKey(0)
    kx, kxb, kwq, kbq, kwk, kbk, kwv, kbv = jax.random.split(key, 8)

    # Deterministic init mimicking nn.Linear's U(-1/sqrt(in), 1/sqrt(in)).
    bound = 1.0 / math.sqrt(D)
    wq = jax.random.uniform(kwq, (D, D), jnp.float32, -bound, bound)
    bq = jax.random.uniform(kbq, (D,),   jnp.float32, -bound, bound)
    wk = jax.random.uniform(kwk, (D, D), jnp.float32, -bound, bound)
    bk = jax.random.uniform(kbk, (D,),   jnp.float32, -bound, bound)
    wv = jax.random.uniform(kwv, (D, D), jnp.float32, -bound, bound)
    bv = jax.random.uniform(kbv, (D,),   jnp.float32, -bound, bound)

    # One-time parameter prep (fuse + transpose + fold 1/sqrt(D) + bf16 + pad output bands).
    w_qkv, b_qkv, d_pad = prepare_qkv_params(wq, bq, wk, bk, wv, bv)
    w_qkv, b_qkv = jax.block_until_ready((w_qkv, b_qkv))

    # bf16 matmul operands + approx reciprocal in the softmax -> 1e-2 tolerance vs f32 ref.
    TOL = dict(atol=1e-2, rtol=1e-2)

    # 1) Single module forward: x [B, D].
    x = jax.random.normal(kx, (B, D), jnp.float32)
    out = self_attention_pallas(x, w_qkv, b_qkv, d_pad)
    jax.block_until_ready(out)
    ref = self_attention_ref(x, wq, bq, wk, bk, wv, bv)
    assert out.shape == (B, D)
    assert jnp.allclose(out, ref, **TOL), "single-problem mismatch vs reference"

    # 2) Batched path: P independent problems, G=32 per grid step -> grid (2,)
    #    (256 MXU rows per fused QKV matmul; 2 steps so v7x can use both TCs).
    P = 64
    xb = jax.random.normal(kxb, (P, B, D), jnp.float32)
    outb = self_attention_pallas(xb, w_qkv, b_qkv, d_pad)
    jax.block_until_ready(outb)
    refb = self_attention_ref(xb, wq, bq, wk, bk, wv, bv)
    assert outb.shape == (P, B, D)
    assert jnp.allclose(outb, refb, **TOL), "batched mismatch vs reference"

    print("KERNEL_OK")
</pallas_src>

<mosaic_0001>
module attributes {stable_mosaic.version = 11 : i64} {
  func.func @_fused_attention_kernel(%arg0: i32, %arg1: memref<1x8x32xf32, #tpu.memory_space<vmem>>, %arg2: memref<32x384xbf16, #tpu.memory_space<vmem>>, %arg3: memref<1x384xf32, #tpu.memory_space<vmem>>, %arg4: memref<1x8x32xf32, #tpu.memory_space<vmem>>) attributes {dimension_semantics = [#tpu.dimension_semantics<parallel>], iteration_bounds = array<i64: 1>, scalar_prefetch = 0 : i64, scratch_operands = 0 : i64, tpu.core_type = #tpu.core_type<tc>, window_params = [{transform_indices = @transform_0, window_bounds = array<i64: 1, 8, 32>}, {pipeline_mode = #tpu.pipeline_mode<synchronous>, transform_indices = @transform_1, window_bounds = array<i64: 32, 384>}, {pipeline_mode = #tpu.pipeline_mode<synchronous>, transform_indices = @transform_2, window_bounds = array<i64: 1, 384>}, {transform_indices = @transform_3, window_bounds = array<i64: 1, 8, 32>}]} {
    %c0 = arith.constant 0 : index
    %c0_0 = arith.constant 0 : index
    %c0_1 = arith.constant 0 : index
    %0 = vector.load %arg1[%c0, %c0_0, %c0_1] : memref<1x8x32xf32, #tpu.memory_space<vmem>>, vector<1x8x32xf32>
    %1 = arith.truncf %0 : vector<1x8x32xf32> to vector<1x8x32xbf16>
    %2 = vector.shape_cast %1 : vector<1x8x32xbf16> to vector<8x32xbf16>
    %c0_2 = arith.constant 0 : index
    %c0_3 = arith.constant 0 : index
    %3 = vector.load %arg2[%c0_2, %c0_3] : memref<32x384xbf16, #tpu.memory_space<vmem>>, vector<32x384xbf16>
    %cst = arith.constant dense<0.000000e+00> : vector<8x384xf32>
    %4 = tpu.matmul %2, %3, %cst {dimension_numbers = #tpu.dot_dimension_numbers<[1], [0], [0], [1], [0, 0, 1, 1], [], []>} : vector<8x32xbf16>, vector<32x384xbf16>, vector<8x384xf32> -> vector<8x384xf32>
    %c0_4 = arith.constant 0 : index
    %c0_5 = arith.constant 0 : index
    %5 = vector.load %arg3[%c0_4, %c0_5] : memref<1x384xf32, #tpu.memory_space<vmem>>, vector<1x384xf32>
    %6 = vector.broadcast %5 : vector<1x384xf32> to vector<8x384xf32>
    %7 = arith.addf %4, %6 : vector<8x384xf32>
    %8 = vector.shape_cast %7 : vector<8x384xf32> to vector<1x8x384xf32>
    %9 = vector.extract_strided_slice %8 {offsets = [0, 0, 0], sizes = [1, 8, 128], strides = [1, 1, 1]} : vector<1x8x384xf32> to vector<1x8x128xf32>
    %10 = vector.extract_strided_slice %8 {offsets = [0, 0, 128], sizes = [1, 8, 128], strides = [1, 1, 1]} : vector<1x8x384xf32> to vector<1x8x128xf32>
    %11 = vector.extract_strided_slice %8 {offsets = [0, 0, 256], sizes = [1, 8, 128], strides = [1, 1, 1]} : vector<1x8x384xf32> to vector<1x8x128xf32>
    %12 = arith.truncf %9 : vector<1x8x128xf32> to vector<1x8x128xbf16>
    %13 = arith.truncf %10 : vector<1x8x128xf32> to vector<1x8x128xbf16>
    "tpu.trace_start"() <{level = 10 : i32, message = "gqd,gkd->gqk"}> : () -> ()
    %cst_6 = arith.constant dense<0.000000e+00> : vector<1x8x8xf32>
    %14 = tpu.matmul %12, %13, %cst_6 {dimension_numbers = #tpu.dot_dimension_numbers<[2], [2], [1], [1], [0, 0, 0, 1, 1, 1], [0], [0]>} : vector<1x8x128xbf16>, vector<1x8x128xbf16>, vector<1x8x8xf32> -> vector<1x8x8xf32>
    "tpu.trace_stop"() : () -> ()
    %cst_7 = arith.constant dense<0xFF800000> : vector<1x8xf32>
    %15 = vector.multi_reduction <maximumf>, %14, %cst_7 [2] : vector<1x8x8xf32> to vector<1x8xf32>
    %16 = vector.shape_cast %15 : vector<1x8xf32> to vector<1x8x1xf32>
    %17 = vector.broadcast %16 : vector<1x8x1xf32> to vector<1x8x8xf32>
    %18 = arith.subf %14, %17 : vector<1x8x8xf32>
    %19 = math.exp %18 : vector<1x8x8xf32>
    %cst_8 = arith.constant dense<0.000000e+00> : vector<1x8xf32>
    %20 = vector.multi_reduction <add>, %19, %cst_8 [2] : vector<1x8x8xf32> to vector<1x8xf32>
    %21 = vector.shape_cast %20 : vector<1x8xf32> to vector<1x8x1xf32>
    %22 = tpu.reciprocal %21 {approx = true} : vector<1x8x1xf32> -> vector<1x8x1xf32>
    %23 = vector.broadcast %22 : vector<1x8x1xf32> to vector<1x8x8xf32>
    %24 = arith.mulf %19, %23 : vector<1x8x8xf32>
    %25 = arith.truncf %24 : vector<1x8x8xf32> to vector<1x8x8xbf16>
    %26 = arith.truncf %11 : vector<1x8x128xf32> to vector<1x8x128xbf16>
    "tpu.trace_start"() <{level = 10 : i32, message = "gqk,gkd->gqd"}> : () -> ()
    %cst_9 = arith.constant dense<0.000000e+00> : vector<1x8x128xf32>
    %27 = tpu.matmul %25, %26, %cst_9 {dimension_numbers = #tpu.dot_dimension_numbers<[2], [1], [1], [2], [0, 0, 0, 1, 1, 2], [0], [0]>} : vector<1x8x8xbf16>, vector<1x8x128xbf16>, vector<1x8x128xf32> -> vector<1x8x128xf32>
    "tpu.trace_stop"() : () -> ()
    %28 = vector.extract_strided_slice %27 {offsets = [0, 0, 0], sizes = [1, 8, 32], strides = [1, 1, 1]} : vector<1x8x128xf32> to vector<1x8x32xf32>
    %c0_10 = arith.constant 0 : index
    %c0_11 = arith.constant 0 : index
    %c0_12 = arith.constant 0 : index
    %29 = vector.load %arg4[%c0_10, %c0_11, %c0_12] : memref<1x8x32xf32, #tpu.memory_space<vmem>>, vector<1x8x32xf32>
    tpu.vector_store %arg4[%c0_10, %c0_11, %c0_12], %28 {strides = array<i32>} : memref<1x8x32xf32, #tpu.memory_space<vmem>>, vector<1x8x32xf32>,
    return
  }
  func.func @transform_0(%arg0: i32) -> (i32, i32, i32) {
    %c0_i32 = arith.constant 0 : i32
    %c0_i32_0 = arith.constant 0 : i32
    %c0_i32_1 = arith.constant 0 : i32
    return %arg0, %c0_i32, %c0_i32_0 : i32, i32, i32
  }
  func.func @transform_1(%arg0: i32) -> (i32, i32) {
    %c0_i32 = arith.constant 0 : i32
    %c0_i32_0 = arith.constant 0 : i32
    %c0_i32_1 = arith.constant 0 : i32
    return %c0_i32, %c0_i32_0 : i32, i32
  }
  func.func @transform_2(%arg0: i32) -> (i32, i32) {
    %c0_i32 = arith.constant 0 : i32
    %c0_i32_0 = arith.constant 0 : i32
    %c0_i32_1 = arith.constant 0 : i32
    return %c0_i32, %c0_i32_0 : i32, i32
  }
  func.func @transform_3(%arg0: i32) -> (i32, i32, i32) {
    %c0_i32 = arith.constant 0 : i32
    %c0_i32_0 = arith.constant 0 : i32
    %c0_i32_1 = arith.constant 0 : i32
    return %arg0, %c0_i32, %c0_i32_0 : i32, i32, i32
  }
}

</mosaic_0001>

<llo_original>
// kernel: tpu_custom_call.1
$region0: #{tpu_custom_call.1}
  #allocation0 [shape = 'u32[]', space=smem, size = 0x4, offset = 0x4, fixed_abs, tag = 'smem constant byte address 0x4 - core index']
  #allocation1 [shape = 'u32[144,128]{1,0:T(1,128)}', space=vmem, size = 0x12000, scoped, tag = 'internal scratch']
  %s0 = inlined_call_operand.hbm [shape: f32[1,8,32], index: 0, kind: input, shape index: {}]
  %s1 = inlined_call_operand.hbm [shape: bf16[32,384], index: 1, kind: input, shape index: {}]
  %s2 = inlined_call_operand.vmem [shape: f32[1,384], index: 2, kind: input, shape index: {}]
  %s3 = inlined_call_operand.hbm [shape: f32[1,8,32], index: 3, kind: output, shape index: {}]
  %s4 = sld [smem:[#allocation0]]
  $region30: #{tpu_custom_call.1} parent=0
    _
  %s6 = ssub.s32 1, %s4
  %s7 = scalar_select 0, %s6, %s4
  $region1: #{tpu_custom_call.1} parent=0
    #allocation2 [shape = 'u8[4096]{0}', space=vmem, size = 0x1000, scoped, tag = 'input window, operand 0, single buffered']
    #allocation3 [shape = 's32[1]{0}', space=sflag, size = 0x4, scoped, tag = 'scoped memory for tpu_custom_call.1']
    #allocation4 [shape = 's32[1]{0}', space=sflag, size = 0x4, scoped, tag = 'scoped memory for tpu_custom_call.1']
    #allocation5 [shape = 'u8[24576]{0}', space=vmem, size = 0x6000, scoped, tag = 'input window, operand 1, single buffered']
    #allocation6 [shape = 's32[1]{0}', space=sflag, size = 0x4, scoped, tag = 'scoped memory for tpu_custom_call.1']
    #allocation7 [shape = 'u8[4096]{0}', space=vmem, size = 0x1000, scoped, tag = 'output window, operand 0, single buffered']
    %8 = vsyncpa [#allocation3], 0
    %9 = vsyncpa [#allocation6], 0
    %10 = vsyncpa [#allocation4], 0
    // Predicated region
    $region2: #{tpu_custom_call.1} parent=1 // pred_check
      _
    $region3: #{tpu_custom_call.1} parent=1 // pred_check_branch
      %12 = sbr.rel (0) target = $region5
    $region4: #{tpu_custom_call.1} parent=1 // pred_region
      %s14 = ssub.s32 128, 128
      %15 = vsyncadd [#allocation3], %s14
      %s17 = sshll.u32 [#allocation2], 4
      %s18 = int_to_ptr.vmem [resolvable:$true] %s17
      %20 = dma.hbm_to_vmem [thread:$0]  %s0, 128, %s18, [#allocation3]
    $region5: #{tpu_custom_call.1} parent=1 // pred_fallthru
      _
    // Predicated region
    $region6: #{tpu_custom_call.1} parent=1 // pred_check
      _
    $region7: #{tpu_custom_call.1} parent=1 // pred_check_branch
      %22 = sbr.rel (0) target = $region9
    $region8: #{tpu_custom_call.1} parent=1 // pred_region
      %s24 = ssub.s32 768, 768
      %25 = vsyncadd [#allocation6], %s24
      %s26 = sshll.u32 [#allocation5], 4
      %s27 = int_to_ptr.vmem [resolvable:$true] %s26
      %32 = dma.hbm_to_vmem [thread:$0]  %s1, 768, %s27, [#allocation6], 192, 192, 12
    $region9: #{tpu_custom_call.1} parent=1 // pred_fallthru
      _
    // Predicated region
    $region10: #{tpu_custom_call.1} parent=1 // pred_check
      _
    $region11: #{tpu_custom_call.1} parent=1 // pred_check_branch
      %34 = sbr.rel (0) target = $region13
    $region12: #{tpu_custom_call.1} parent=1 // pred_region
      _
    $region13: #{tpu_custom_call.1} parent=1 // pred_fallthru
      _
    // Predicated region
    $region14: #{tpu_custom_call.1} parent=1 // pred_check
      _
    $region15: #{tpu_custom_call.1} parent=1 // pred_check_branch
      %36 = sbr.rel (0) target = $region17
    $region16: #{tpu_custom_call.1} parent=1 // pred_region
      %37 = dma.done [#allocation3], 128
    $region17: #{tpu_custom_call.1} parent=1 // pred_fallthru
      _
    // Predicated region
    $region18: #{tpu_custom_call.1} parent=1 // pred_check
      _
    $region19: #{tpu_custom_call.1} parent=1 // pred_check_branch
      %39 = sbr.rel (0) target = $region21
    $region20: #{tpu_custom_call.1} parent=1 // pred_region
      %40 = dma.done [#allocation6], 768
    $region21: #{tpu_custom_call.1} parent=1 // pred_fallthru
      _
    %v42 = vld [vmem:[#allocation2] sm:$0xff]
    %v43 = vpack.c.bf16 %v42, %v42
    %v44 = vld [vmem:[#allocation5] sm:$0xff]
    %v45 = vld [vmem:[#allocation5 + $0x8] sm:$0xf]
    %v46 = vld [vmem:[#allocation5 + $0xc] sm:$0xff]
    %v47 = vld [vmem:[#allocation5 + $0x14] sm:$0xf]
    %v48 = vld [vmem:[#allocation5 + $0x18] sm:$0xff]
    %v49 = vld [vmem:[#allocation5 + $0x20] sm:$0xf]
    %v50 = vld [vmem:[#allocation5 + $0x24] sm:$0xff]
    %v51 = vld [vmem:[#allocation5 + $0x2c] sm:$0xf]
    %v52 = vld [vmem:[%s2] sm:$0x7]
    %v54 = vlaneseq
    %v55 = vshrl.u32 %v54, 7
    %v56 = vsub.s32 0, %v55
    %v57 = vrot.slane %v52, %v56
    %v58 = vlaneseq
    %v59 = vshrl.u32 %v58, 7
    %v60 = vsub.s32 1, %v59
    %v61 = vrot.slane %v52, %v60
    %v62 = vlaneseq
    %v63 = vshrl.u32 %v62, 7
    %v64 = vsub.s32 2, %v63
    %v65 = vrot.slane %v52, %v64
    %v77 = vunpack.c.l.b16 %v44
    %v78 = vunpack.c.h.b16 %v44
    %v79 = vunpack.c.l.b16 %v45
    %v80 = vunpack.c.l.b16 %v46
    %v81 = vunpack.c.h.b16 %v46
    %v82 = vunpack.c.l.b16 %v47
    %v83 = vunpack.c.l.b16 %v48
    %v84 = vunpack.c.h.b16 %v48
    %v85 = vunpack.c.l.b16 %v49
    %v86 = vunpack.c.l.b16 %v50
    %v87 = vunpack.c.h.b16 %v50
    %v88 = vunpack.c.l.b16 %v51
    %v89 = vpack.c.b16 %v80, %v77
    %v90 = vpack.c.b16 %v81, %v78
    %v91 = vpack.c.b16 %v82, %v79
    %v92 = vpack.c.b16 %v86, %v83
    %v93 = vpack.c.b16 %v87, %v84
    %v94 = vpack.c.b16 %v88, %v85
    %vm101 = vcmask 261120
    %v103 = vsel %vm101, %v43, 0
    %105 = vmatprep.subr.bf16.mxu0 %v90
    %106 = vmatpush1.bf16.msra.mxu0 %v89
    %107 = vmatprep.subr.bf16.mxu0 %v93
    %108 = vmatpush1.bf16.msra.mxu0 %v92
    %109 = vmatprep.subr.bf16.mxu0 0
    %110 = vmatpush1.bf16.msra.mxu0 0
    %111 = vmatprep.subr.bf16.mxu0 0
    %112 = vmatpush1.bf16.msra.mxu0 0
    %113 = vmatprep.subr.bf16.mxu0 0
    %114 = vmatpush1.bf16.msra.mxu0 0
    %115 = vmatprep.subr.bf16.mxu0 0
    %116 = vmatpush1.bf16.msra.mxu0 0
    %117 = vmatprep.subr.bf16.mxu0 0
    %118 = vmatpush1.bf16.msra.mxu0 0
    %119 = vmatprep.subr.bf16.mxu0 0
    %120 = vmatpush1.bf16.msra.mxu0 0
    %121 = vmatprep.subr.bf16.mxu0 0
    %122 = vmatpush1.bf16.msra.mxu0 0
    %123 = vmatprep.subr.bf16.mxu0 0
    %124 = vmatpush1.bf16.msra.mxu0 0
    %125 = vmatprep.subr.bf16.mxu0 0
    %126 = vmatpush1.bf16.msra.mxu0 0
    %127 = vmatprep.subr.bf16.mxu0 0
    %128 = vmatpush1.bf16.msra.mxu0 0
    %129 = vmatprep.subr.bf16.mxu0 0
    %130 = vmatpush1.bf16.msra.mxu0 0
    %131 = vmatprep.subr.bf16.mxu0 0
    %132 = vmatpush1.bf16.msra.mxu0 0
    %133 = vmatprep.subr.bf16.mxu0 0
    %134 = vmatpush1.bf16.msra.mxu0 0
    %135 = vmatprep.subr.bf16.mxu0 0
    %136 = vmatpush1.bf16.msra.mxu0 0
    %137 = vmatprep.mubr.bf16.mxu0 0
    %138 = vmatmul.mubr.bf16.gmra.mrb[0].mxu0 %v103
    %v139 = vpop.f32.mrb[0].mxu0
    %v140 = vadd.f32 %v57, %v139
    %v141 = vpop.f32.mrb[0].mxu0
    %v142 = vadd.f32 %v61, %v141
    %v143 = vpop.f32.mrb[0].mxu0
    %v144 = vpop.f32.mrb[0].mxu0
    %145 = vdwg.mxu0
    %146 = vmatprep.subr.bf16.mxu0 0
    %147 = vmatpush1.bf16.msra.mxu0 %v91
    %148 = vmatprep.subr.bf16.mxu0 0
    %149 = vmatpush1.bf16.msra.mxu0 %v94
    %150 = vmatprep.subr.bf16.mxu0 0
    %151 = vmatpush1.bf16.msra.mxu0 0
    %152 = vmatprep.subr.bf16.mxu0 0
    %153 = vmatpush1.bf16.msra.mxu0 0
    %154 = vmatprep.subr.bf16.mxu0 0
    %155 = vmatpush1.bf16.msra.mxu0 0
    %156 = vmatprep.subr.bf16.mxu0 0
    %157 = vmatpush1.bf16.msra.mxu0 0
    %158 = vmatprep.subr.bf16.mxu0 0
    %159 = vmatpush1.bf16.msra.mxu0 0
    %160 = vmatprep.subr.bf16.mxu0 0
    %161 = vmatpush1.bf16.msra.mxu0 0
    %162 = vmatprep.subr.bf16.mxu0 0
    %163 = vmatpush1.bf16.msra.mxu0 0
    %164 = vmatprep.subr.bf16.mxu0 0
    %165 = vmatpush1.bf16.msra.mxu0 0
    %166 = vmatprep.subr.bf16.mxu0 0
    %167 = vmatpush1.bf16.msra.mxu0 0
    %168 = vmatprep.subr.bf16.mxu0 0
    %169 = vmatpush1.bf16.msra.mxu0 0
    %170 = vmatprep.subr.bf16.mxu0 0
    %171 = vmatpush1.bf16.msra.mxu0 0
    %172 = vmatprep.subr.bf16.mxu0 0
    %173 = vmatpush1.bf16.msra.mxu0 0
    %174 = vmatprep.subr.bf16.mxu0 0
    %175 = vmatpush1.bf16.msra.mxu0 0
    %176 = vmatprep.subr.bf16.mxu0 0
    %177 = vmatpush1.bf16.msra.mxu0 0
    %178 = vmatprep.mubr.bf16.mxu0 0
    %179 = vmatmul.mubr.bf16.gmra.mrb[0].mxu0 %v103
    %v180 = vpop.f32.mrb[0].mxu0
    %v181 = vadd.f32 %v65, %v180
    %v182 = vpop.f32.mrb[0].mxu0
    %v183 = vpop.f32.mrb[0].mxu0
    %v184 = vpop.f32.mrb[0].mxu0
    %185 = vdwg.mxu0
    %v186 = vpack.c.bf16 %v140, %v140
    %v187 = vpack.c.bf16 %v142, %v142
    %188 = vmatprep.subr.bf16.mxu0 0
    %189 = vmatpush1.bf16.xpose.msra.mxu0 %v187
    %190 = vmatprep.subr.bf16.mxu0 0
    %191 = vmatpush1.bf16.xpose.msra.mxu0 0
    %192 = vmatprep.subr.bf16.mxu0 0
    %193 = vmatpush1.bf16.xpose.msra.mxu0 0
    %194 = vmatprep.subr.bf16.mxu0 0
    %195 = vmatpush1.bf16.xpose.msra.mxu0 0
    %196 = vmatprep.subr.bf16.mxu0 0
    %197 = vmatpush1.bf16.xpose.msra.mxu0 0
    %198 = vmatprep.subr.bf16.mxu0 0
    %199 = vmatpush1.bf16.xpose.msra.mxu0 0
    %200 = vmatprep.subr.bf16.mxu0 0
    %201 = vmatpush1.bf16.xpose.msra.mxu0 0
    %202 = vmatprep.subr.bf16.mxu0 0
    %203 = vmatpush1.bf16.xpose.msra.mxu0 0
    %204 = vmatprep.subr.bf16.mxu0 0
    %205 = vmatpush1.bf16.xpose.msra.mxu0 0
    %206 = vmatprep.subr.bf16.mxu0 0
    %207 = vmatpush1.bf16.xpose.msra.mxu0 0
    %208 = vmatprep.subr.bf16.mxu0 0
    %209 = vmatpush1.bf16.xpose.msra.mxu0 0
    %210 = vmatprep.subr.bf16.mxu0 0
    %211 = vmatpush1.bf16.xpose.msra.mxu0 0
    %212 = vmatprep.subr.bf16.mxu0 0
    %213 = vmatpush1.bf16.xpose.msra.mxu0 0
    %214 = vmatprep.subr.bf16.mxu0 0
    %215 = vmatpush1.bf16.xpose.msra.mxu0 0
    %216 = vmatprep.subr.bf16.mxu0 0
    %217 = vmatpush1.bf16.xpose.msra.mxu0 0
    %218 = vmatprep.subr.bf16.mxu0 0
    %219 = vmatpush1.bf16.xpose.msra.mxu0 0
    %220 = vmatprep.mubr.bf16.mxu0 0
    %221 = vmatmul.mubr.bf16.gmra.mrb[0].mxu0 %v186
    %v222 = vpop.f32.mrb[0].mxu0
    %v223 = vadd.f32 0.0, %v222
    %v224 = vpop.f32.mrb[0].mxu0
    %v225 = vpop.f32.mrb[0].mxu0
    %v226 = vpop.f32.mrb[0].mxu0
    %227 = vdwg.mxu0
    %vm228 = vcmask 64512
    %v229 = vsel %vm228, %v223, -inf
    %230 = vmax.xlane.f32.xlu0 %v229
    %v231 = vpop.xlane.xlu0 %230
    %v232 = vsub.f32 %v223, %v231
    %v233 = vmul.f32 %v232, 1.442695
    %v234 = vpow.pop %v233
    %v235 = vsel %vm228, %v234, 0.0
    %236 = vadd.xlane.f32.xlu0 %v235
    %v237 = vpop.xlane.xlu0 %236
    %v238 = vrcp.pop %v237
    %v239 = vmul.f32 %v234, %v238
    %v240 = vpack.c.bf16 %v239, %v239
    %v241 = vpack.c.bf16 %v181, %v181
    %v243 = vsel %vm228, %v240, 0
    %vm245 = vcmask 1043456
    %v247 = vsel %vm245, %v241, 0
    %249 = vmatprep.subr.bf16.mxu0 0
    %250 = vmatpush1.bf16.msra.mxu0 %v247
    %251 = vmatprep.subr.bf16.mxu0 0
    %252 = vmatpush1.bf16.msra.mxu0 0
    %253 = vmatprep.subr.bf16.mxu0 0
    %254 = vmatpush1.bf16.msra.mxu0 0
    %255 = vmatprep.subr.bf16.mxu0 0
    %256 = vmatpush1.bf16.msra.mxu0 0
    %257 = vmatprep.subr.bf16.mxu0 0
    %258 = vmatpush1.bf16.msra.mxu0 0
    %259 = vmatprep.subr.bf16.mxu0 0
    %260 = vmatpush1.bf16.msra.mxu0 0
    %261 = vmatprep.subr.bf16.mxu0 0
    %262 = vmatpush1.bf16.msra.mxu0 0
    %263 = vmatprep.subr.bf16.mxu0 0
    %264 = vmatpush1.bf16.msra.mxu0 0
    %265 = vmatprep.subr.bf16.mxu0 0
    %266 = vmatpush1.bf16.msra.mxu0 0
    %267 = vmatprep.subr.bf16.mxu0 0
    %268 = vmatpush1.bf16.msra.mxu0 0
    %269 = vmatprep.subr.bf16.mxu0 0
    %270 = vmatpush1.bf16.msra.mxu0 0
    %271 = vmatprep.subr.bf16.mxu0 0
    %272 = vmatpush1.bf16.msra.mxu0 0
    %273 = vmatprep.subr.bf16.mxu0 0
    %274 = vmatpush1.bf16.msra.mxu0 0
    %275 = vmatprep.subr.bf16.mxu0 0
    %276 = vmatpush1.bf16.msra.mxu0 0
    %277 = vmatprep.subr.bf16.mxu0 0
    %278 = vmatpush1.bf16.msra.mxu0 0
    %279 = vmatprep.subr.bf16.mxu0 0
    %280 = vmatpush1.bf16.msra.mxu0 0
    %281 = vmatprep.mubr.bf16.mxu0 0
    %282 = vmatmul.mubr.bf16.gmra.mrb[0].mxu0 %v243
    %v283 = vpop.f32.mrb[0].mxu0
    %v284 = vadd.f32 0.0, %v283
    %v285 = vpop.f32.mrb[0].mxu0
    %v286 = vpop.f32.mrb[0].mxu0
    %v287 = vpop.f32.mrb[0].mxu0
    %288 = vdwg.mxu0
    %289 = vst.msk [vmem:[#allocation7] sm:$0xff] %vm101, %v284
    // Predicated region
    $region22: #{tpu_custom_call.1} parent=1 // pred_check
      _
    $region23: #{tpu_custom_call.1} parent=1 // pred_check_branch
      %291 = sbr.rel (0) target = $region25
    $region24: #{tpu_custom_call.1} parent=1 // pred_region
      %s293 = ssub.s32 128, 128
      %294 = vsyncadd [#allocation4], %s293
      %s296 = sshll.u32 [#allocation7], 4
      %s297 = int_to_ptr.vmem [resolvable:$true] %s296
      %299 = dma.vmem_to_hbm [thread:$0]  %s297, 128, %s3, [#allocation4]
    $region25: #{tpu_custom_call.1} parent=1 // pred_fallthru
      _
    // Predicated region
    $region26: #{tpu_custom_call.1} parent=1 // pred_check
      _
    $region27: #{tpu_custom_call.1} parent=1 // pred_check_branch
      %301 = sbr.rel (0) target = $region29
    $region28: #{tpu_custom_call.1} parent=1 // pred_region
      %302 = dma.done [#allocation4], 128
    $region29: #{tpu_custom_call.1} parent=1 // pred_fallthru
      _
    %303 = vsyncpa [#allocation3], 1
    %304 = vsyncpa [#allocation6], 1
    %305 = vsyncpa [#allocation4], 1

</llo_original>
